<compile_context>
chip_gen: v6e
topology: v6e:2x2x1
jax: 0.10.0
libtpu: 0.0.40
codegen_flags: <defaults>
</compile_context>

<pallas_src>
import functools

import jax
import jax.numpy as jnp
import numpy as np
from jax.experimental import pallas as pl
from jax.experimental.pallas import tpu as pltpu

H_IN = 40                      # conv input height (fixed by rnn input size 32*20*1)
C_OUT = 32                     # conv output channels
H_POOL = 20                    # height after MaxPool2d((2,1), 2)
RNN_IN = C_OUT * H_POOL        # 640 = 5 * 128 lanes
RNN_HID = 64
FC1 = 128
NCLASS = 10
OUT_PAD = 128                  # fc2 output padded to a full lane width


def _round_up(x, m):
    return (x + m - 1) // m * m


# ---------------------------------------------------------------------------
# Fused kernel: conv+relu+pool (as lane-dense matmul) -> RNN step -> fc1 -> fc2
# ---------------------------------------------------------------------------
def _fused_kernel(x_ref, wc_ref, bc_ref, wih_ref, brnn_ref,
                  w1_ref, b1_ref, w2_ref, b2_ref, o_ref):
    # conv rows for all (channel, pooled position):
    #   cols [:, :640]  = conv at even rows h = 2j   (flat index c*20 + j)
    #   cols [:, 640:]  = conv at odd  rows h = 2j+1
    conv = jnp.dot(x_ref[...], wc_ref[...], preferred_element_type=jnp.float32)
    # relu(max(even,odd) + b) == maxpool(relu(conv + b)); bias added once after max.
    pooled = jnp.maximum(
        jnp.maximum(conv[:, :RNN_IN], conv[:, RNN_IN:]) + bc_ref[...], 0.0)
    # single-step vanilla RNN with h0 = 0  ->  W_hh never contributes.
    h = jnp.tanh(jnp.dot(pooled, wih_ref[...],
                         preferred_element_type=jnp.float32) + brnn_ref[...])
    f1 = jnp.maximum(
        jnp.dot(h, w1_ref[...], preferred_element_type=jnp.float32) + b1_ref[...],
        0.0)
    o_ref[...] = (jnp.dot(f1, w2_ref[...], preferred_element_type=jnp.float32)
                  + b2_ref[...])


# ---------------------------------------------------------------------------
# One-time parameter repacking (hoisted out of the forward path)
# ---------------------------------------------------------------------------
def _build_conv_operands(conv_w, conv_b):
    """Fold Conv2d(1,32,(3,1),pad=(1,0)) + torch flatten order into a (40,1280) matmul.

    Column c*20+j        -> conv output at even row h=2j   for channel c
    Column 640 + c*20+j  -> conv output at odd  row h=2j+1 for channel c
    """
    w = np.asarray(conv_w, np.float32)       # (32, 3)
    b = np.asarray(conv_b, np.float32)       # (32,)
    W = np.zeros((H_IN, 2 * RNN_IN), np.float32)
    for c in range(C_OUT):
        for j in range(H_POOL):
            col = c * H_POOL + j
            for k in range(3):
                q_even = 2 * j + k - 1       # conv row 2j   reads x[2j + k - 1]
                if 0 <= q_even < H_IN:
                    W[q_even, col] += w[c, k]
                q_odd = 2 * j + k            # conv row 2j+1 reads x[2j + k]
                if 0 <= q_odd < H_IN:
                    W[q_odd, RNN_IN + col] += w[c, k]
    b_vec = np.repeat(b, H_POOL)[None, :]    # (1, 640) in c*20+j order
    return jnp.asarray(W), jnp.asarray(b_vec)


def prepare_params(p):
    """Repack torch-layout params into the kernel's lane-dense layout (once)."""
    w_conv, b_conv = _build_conv_operands(p["conv_w"], p["conv_b"])
    w_fc2_t = jnp.zeros((FC1, OUT_PAD), jnp.float32).at[:, :NCLASS].set(p["w_fc2"].T)
    b_fc2 = jnp.zeros((1, OUT_PAD), jnp.float32).at[0, :NCLASS].set(p["b_fc2"])
    return {
        "w_conv":  w_conv,                            # (40, 1280)
        "b_conv":  b_conv,                            # (1, 640)
        "w_ih_t":  jnp.asarray(p["w_ih"]).T,          # (640, 64)
        "b_rnn":   (p["b_ih"] + p["b_hh"])[None, :],  # (1, 64)  pre-summed
        "w_fc1_t": jnp.asarray(p["w_fc1"]).T,         # (64, 128)
        "b_fc1":   p["b_fc1"][None, :],               # (1, 128)
        "w_fc2_t": w_fc2_t,                           # (128, 128) zero-padded cols 10..127
        "b_fc2":   b_fc2,                             # (1, 128)   zero-padded
    }


# ---------------------------------------------------------------------------
# Forward
# ---------------------------------------------------------------------------
@functools.partial(jax.jit, static_argnames=("tile_n",))
def cnn_rnn_forward(x, kparams, tile_n=512):
    """x: (N, 1, 40, 1) float32 NCHW (as in PyTorch). Returns (N, 10) logits."""
    n = x.shape[0]
    xs = x[:, 0, :, 0]                                  # (N, 40): squeeze C_in=1, W=1
    tile = min(tile_n, _round_up(n, 8))                 # multiple of 8 sublanes
    n_pad = _round_up(n, tile)
    if n_pad != n:
        xs = jnp.pad(xs, ((0, n_pad - n), (0, 0)))

    weights = (kparams["w_conv"], kparams["b_conv"],
               kparams["w_ih_t"], kparams["b_rnn"],
               kparams["w_fc1_t"], kparams["b_fc1"],
               kparams["w_fc2_t"], kparams["b_fc2"])

    def w_spec(a):                                      # full-array resident block
        return pl.BlockSpec(a.shape, lambda i: (0, 0))

    out = pl.pallas_call(
        _fused_kernel,
        out_shape=jax.ShapeDtypeStruct((n_pad, OUT_PAD), jnp.float32),
        grid=(n_pad // tile,),
        in_specs=[pl.BlockSpec((tile, H_IN), lambda i: (i, 0))]
                 + [w_spec(w) for w in weights],
        out_specs=pl.BlockSpec((tile, OUT_PAD), lambda i: (i, 0)),
        compiler_params=pltpu.CompilerParams(
            dimension_semantics=("parallel",)),         # v7x: split batch over 2 TCs
    )(xs, *weights)
    return out[:n, :NCLASS]


# ---------------------------------------------------------------------------
# Pure-JAX reference = direct translation of the PyTorch forward.
# ---------------------------------------------------------------------------
def reference_forward(x, params):
    n = x.shape[0]
    xs = x[:, 0, :, 0]
    xpad = jnp.pad(xs, ((0, 0), (1, 1)))
    patches = jnp.stack([xpad[:, k:k + H_IN] for k in range(3)], axis=-1)   # (N,40,3)
    conv = (jnp.einsum('nhk,ck->nch', patches, params["conv_w"])
            + params["conv_b"][None, :, None])                              # (N,32,40)
    conv = jnp.maximum(conv, 0.0)
    pooled = conv.reshape(n, C_OUT, H_POOL, 2).max(axis=-1)                  # (N,32,20)
    xflat = pooled.reshape(n, RNN_IN)
    h = jnp.tanh(xflat @ params["w_ih"].T + params["b_ih"] + params["b_hh"])
    f1 = jnp.maximum(h @ params["w_fc1"].T + params["b_fc1"], 0.0)
    return f1 @ params["w_fc2"].T + params["b_fc2"]


def init_params(key):
    ks = jax.random.split(key, 9)

    def u(k, shape, fan_in):
        bound = 1.0 / jnp.sqrt(jnp.float32(fan_in))
        return jax.random.uniform(k, shape, jnp.float32, -bound, bound)

    # nn.RNN also owns weight_hh_l0, but with seq_len=1 and h0=0 it never contributes
    # to the forward pass, so it is not materialized here.
    return {
        "conv_w": u(ks[0], (C_OUT, 3), 3),          # torch conv weight (32,1,3,1) squeezed
        "conv_b": u(ks[1], (C_OUT,), 3),
        "w_ih":   u(ks[2], (RNN_HID, RNN_IN), RNN_HID),
        "b_ih":   u(ks[3], (RNN_HID,), RNN_HID),
        "b_hh":   u(ks[4], (RNN_HID,), RNN_HID),
        "w_fc1":  u(ks[5], (FC1, RNN_HID), RNN_HID),
        "b_fc1":  u(ks[6], (FC1,), RNN_HID),
        "w_fc2":  u(ks[7], (NCLASS, FC1), FC1),
        "b_fc2":  u(ks[8], (NCLASS,), FC1),
    }


if __name__ == "__main__":
    key = jax.random.PRNGKey(0)
    pkey, xkey = jax.random.split(key)
    params = init_params(pkey)
    kparams = prepare_params(params)            # one-time repack, outside forward path

    N = 8
    x = jax.random.normal(xkey, (N, 1, H_IN, 1), jnp.float32)   # NCHW

    out = cnn_rnn_forward(x, kparams)
    out = jax.block_until_ready(out)
    assert out.shape == (N, NCLASS)

    ref = reference_forward(x, params)
    # Tolerance accounts for possible reduced-precision f32 handling on the MXU for the
    # fused conv-as-matmul vs the tiny-K reference einsum; structural errors (wrong
    # flatten order, missing bias/relu, transposed weight) are O(0.1+) and still caught.
    if not bool(jnp.allclose(out, ref, atol=2e-2, rtol=2e-2)):
        raise AssertionError(
            f"kernel/reference mismatch, max abs err {jnp.max(jnp.abs(out - ref))}")
    print("KERNEL_OK")
</pallas_src>

<mosaic_0001>
module attributes {stable_mosaic.version = 11 : i64} {
  func.func @_fused_kernel(%arg0: i32, %arg1: memref<8x40xf32, #tpu.memory_space<vmem>>, %arg2: memref<40x1280xf32, #tpu.memory_space<vmem>>, %arg3: memref<1x640xf32, #tpu.memory_space<vmem>>, %arg4: memref<640x64xf32, #tpu.memory_space<vmem>>, %arg5: memref<1x64xf32, #tpu.memory_space<vmem>>, %arg6: memref<64x128xf32, #tpu.memory_space<vmem>>, %arg7: memref<1x128xf32, #tpu.memory_space<vmem>>, %arg8: memref<128x128xf32, #tpu.memory_space<vmem>>, %arg9: memref<1x128xf32, #tpu.memory_space<vmem>>, %arg10: memref<8x128xf32, #tpu.memory_space<vmem>>) attributes {dimension_semantics = [#tpu.dimension_semantics<parallel>], iteration_bounds = array<i64: 1>, scalar_prefetch = 0 : i64, scratch_operands = 0 : i64, tpu.core_type = #tpu.core_type<tc>, window_params = [{transform_indices = @transform_0, window_bounds = array<i64: 8, 40>}, {pipeline_mode = #tpu.pipeline_mode<synchronous>, transform_indices = @transform_1, window_bounds = array<i64: 40, 1280>}, {pipeline_mode = #tpu.pipeline_mode<synchronous>, transform_indices = @transform_2, window_bounds = array<i64: 1, 640>}, {pipeline_mode = #tpu.pipeline_mode<synchronous>, transform_indices = @transform_3, window_bounds = array<i64: 640, 64>}, {pipeline_mode = #tpu.pipeline_mode<synchronous>, transform_indices = @transform_4, window_bounds = array<i64: 1, 64>}, {pipeline_mode = #tpu.pipeline_mode<synchronous>, transform_indices = @transform_5, window_bounds = array<i64: 64, 128>}, {pipeline_mode = #tpu.pipeline_mode<synchronous>, transform_indices = @transform_6, window_bounds = array<i64: 1, 128>}, {pipeline_mode = #tpu.pipeline_mode<synchronous>, transform_indices = @transform_7, window_bounds = array<i64: 128, 128>}, {pipeline_mode = #tpu.pipeline_mode<synchronous>, transform_indices = @transform_8, window_bounds = array<i64: 1, 128>}, {transform_indices = @transform_9, window_bounds = array<i64: 8, 128>}]} {
    %c0 = arith.constant 0 : index
    %c0_0 = arith.constant 0 : index
    %0 = vector.load %arg1[%c0, %c0_0] : memref<8x40xf32, #tpu.memory_space<vmem>>, vector<8x40xf32>
    %c0_1 = arith.constant 0 : index
    %c0_2 = arith.constant 0 : index
    %1 = vector.load %arg2[%c0_1, %c0_2] : memref<40x1280xf32, #tpu.memory_space<vmem>>, vector<40x1280xf32>
    %cst = arith.constant dense<0.000000e+00> : vector<8x1280xf32>
    %2 = tpu.matmul %0, %1, %cst {dimension_numbers = #tpu.dot_dimension_numbers<[1], [0], [0], [1], [0, 0, 1, 1], [], []>} : vector<8x40xf32>, vector<40x1280xf32>, vector<8x1280xf32> -> vector<8x1280xf32>
    %3 = vector.extract_strided_slice %2 {offsets = [0, 0], sizes = [8, 640], strides = [1, 1]} : vector<8x1280xf32> to vector<8x640xf32>
    %4 = vector.extract_strided_slice %2 {offsets = [0, 640], sizes = [8, 640], strides = [1, 1]} : vector<8x1280xf32> to vector<8x640xf32>
    %5 = arith.maximumf %3, %4 : vector<8x640xf32>
    %c0_3 = arith.constant 0 : index
    %c0_4 = arith.constant 0 : index
    %6 = vector.load %arg3[%c0_3, %c0_4] : memref<1x640xf32, #tpu.memory_space<vmem>>, vector<1x640xf32>
    %7 = vector.broadcast %6 : vector<1x640xf32> to vector<8x640xf32>
    %8 = arith.addf %5, %7 : vector<8x640xf32>
    %cst_5 = arith.constant 0.000000e+00 : f32
    %9 = vector.broadcast %cst_5 : f32 to vector<8x640xf32>
    %10 = arith.maximumf %8, %9 : vector<8x640xf32>
    %c0_6 = arith.constant 0 : index
    %c0_7 = arith.constant 0 : index
    %11 = vector.load %arg4[%c0_6, %c0_7] : memref<640x64xf32, #tpu.memory_space<vmem>>, vector<640x64xf32>
    %cst_8 = arith.constant dense<0.000000e+00> : vector<8x64xf32>
    %12 = tpu.matmul %10, %11, %cst_8 {dimension_numbers = #tpu.dot_dimension_numbers<[1], [0], [0], [1], [0, 0, 1, 1], [], []>} : vector<8x640xf32>, vector<640x64xf32>, vector<8x64xf32> -> vector<8x64xf32>
    %c0_9 = arith.constant 0 : index
    %c0_10 = arith.constant 0 : index
    %13 = vector.load %arg5[%c0_9, %c0_10] : memref<1x64xf32, #tpu.memory_space<vmem>>, vector<1x64xf32>
    %14 = vector.broadcast %13 : vector<1x64xf32> to vector<8x64xf32>
    %15 = arith.addf %12, %14 : vector<8x64xf32>
    %16 = math.tanh %15 : vector<8x64xf32>
    %c0_11 = arith.constant 0 : index
    %c0_12 = arith.constant 0 : index
    %17 = vector.load %arg6[%c0_11, %c0_12] : memref<64x128xf32, #tpu.memory_space<vmem>>, vector<64x128xf32>
    %cst_13 = arith.constant dense<0.000000e+00> : vector<8x128xf32>
    %18 = tpu.matmul %16, %17, %cst_13 {dimension_numbers = #tpu.dot_dimension_numbers<[1], [0], [0], [1], [0, 0, 1, 1], [], []>} : vector<8x64xf32>, vector<64x128xf32>, vector<8x128xf32> -> vector<8x128xf32>
    %c0_14 = arith.constant 0 : index
    %c0_15 = arith.constant 0 : index
    %19 = vector.load %arg7[%c0_14, %c0_15] : memref<1x128xf32, #tpu.memory_space<vmem>>, vector<1x128xf32>
    %20 = vector.broadcast %19 : vector<1x128xf32> to vector<8x128xf32>
    %21 = arith.addf %18, %20 : vector<8x128xf32>
    %cst_16 = arith.constant 0.000000e+00 : f32
    %22 = vector.broadcast %cst_16 : f32 to vector<8x128xf32>
    %23 = arith.maximumf %21, %22 : vector<8x128xf32>
    %c0_17 = arith.constant 0 : index
    %c0_18 = arith.constant 0 : index
    %24 = vector.load %arg8[%c0_17, %c0_18] : memref<128x128xf32, #tpu.memory_space<vmem>>, vector<128x128xf32>
    %cst_19 = arith.constant dense<0.000000e+00> : vector<8x128xf32>
    %25 = tpu.matmul %23, %24, %cst_19 {dimension_numbers = #tpu.dot_dimension_numbers<[1], [0], [0], [1], [0, 0, 1, 1], [], []>} : vector<8x128xf32>, vector<128x128xf32>, vector<8x128xf32> -> vector<8x128xf32>
    %c0_20 = arith.constant 0 : index
    %c0_21 = arith.constant 0 : index
    %26 = vector.load %arg9[%c0_20, %c0_21] : memref<1x128xf32, #tpu.memory_space<vmem>>, vector<1x128xf32>
    %27 = vector.broadcast %26 : vector<1x128xf32> to vector<8x128xf32>
    %28 = arith.addf %25, %27 : vector<8x128xf32>
    %c0_22 = arith.constant 0 : index
    %c0_23 = arith.constant 0 : index
    %29 = vector.load %arg10[%c0_22, %c0_23] : memref<8x128xf32, #tpu.memory_space<vmem>>, vector<8x128xf32>
    tpu.vector_store %arg10[%c0_22, %c0_23], %28 {strides = array<i32>} : memref<8x128xf32, #tpu.memory_space<vmem>>, vector<8x128xf32>,
    return
  }
  func.func @transform_0(%arg0: i32) -> (i32, i32) {
    %c0_i32 = arith.constant 0 : i32
    %c0_i32_0 = arith.constant 0 : i32
    return %arg0, %c0_i32 : i32, i32
  }
  func.func @transform_1(%arg0: i32) -> (i32, i32) {
    %c0_i32 = arith.constant 0 : i32
    %c0_i32_0 = arith.constant 0 : i32
    %c0_i32_1 = arith.constant 0 : i32
    return %c0_i32, %c0_i32_0 : i32, i32
  }
  func.func @transform_2(%arg0: i32) -> (i32, i32) {
    %c0_i32 = arith.constant 0 : i32
    %c0_i32_0 = arith.constant 0 : i32
    %c0_i32_1 = arith.constant 0 : i32
    return %c0_i32, %c0_i32_0 : i32, i32
  }
  func.func @transform_3(%arg0: i32) -> (i32, i32) {
    %c0_i32 = arith.constant 0 : i32
    %c0_i32_0 = arith.constant 0 : i32
    %c0_i32_1 = arith.constant 0 : i32
    return %c0_i32, %c0_i32_0 : i32, i32
  }
  func.func @transform_4(%arg0: i32) -> (i32, i32) {
    %c0_i32 = arith.constant 0 : i32
    %c0_i32_0 = arith.constant 0 : i32
    %c0_i32_1 = arith.constant 0 : i32
    return %c0_i32, %c0_i32_0 : i32, i32
  }
  func.func @transform_5(%arg0: i32) -> (i32, i32) {
    %c0_i32 = arith.constant 0 : i32
    %c0_i32_0 = arith.constant 0 : i32
    %c0_i32_1 = arith.constant 0 : i32
    return %c0_i32, %c0_i32_0 : i32, i32
  }
  func.func @transform_6(%arg0: i32) -> (i32, i32) {
    %c0_i32 = arith.constant 0 : i32
    %c0_i32_0 = arith.constant 0 : i32
    %c0_i32_1 = arith.constant 0 : i32
    return %c0_i32, %c0_i32_0 : i32, i32
  }
  func.func @transform_7(%arg0: i32) -> (i32, i32) {
    %c0_i32 = arith.constant 0 : i32
    %c0_i32_0 = arith.constant 0 : i32
    %c0_i32_1 = arith.constant 0 : i32
    return %c0_i32, %c0_i32_0 : i32, i32
  }
  func.func @transform_8(%arg0: i32) -> (i32, i32) {
    %c0_i32 = arith.constant 0 : i32
    %c0_i32_0 = arith.constant 0 : i32
    %c0_i32_1 = arith.constant 0 : i32
    return %c0_i32, %c0_i32_0 : i32, i32
  }
  func.func @transform_9(%arg0: i32) -> (i32, i32) {
    %c0_i32 = arith.constant 0 : i32
    %c0_i32_0 = arith.constant 0 : i32
    return %arg0, %c0_i32 : i32, i32
  }
}

</mosaic_0001>

<llo_original>
// kernel: cnn_rnn_forward.1
$region0: #{cnn_rnn_forward.1}
  #allocation0 [shape = 'u32[]', space=smem, size = 0x4, offset = 0x4, fixed_abs, tag = 'smem constant byte address 0x4 - core index']
  #allocation1 [shape = 'u32[144,128]{1,0:T(1,128)}', space=vmem, size = 0x12000, scoped, tag = 'internal scratch']
  %s0 = inlined_call_operand.vmem [shape: f32[8,40], index: 0, kind: input, shape index: {}]
  %s1 = inlined_call_operand.vmem [shape: f32[40,1280], index: 1, kind: input, shape index: {}]
  %s2 = inlined_call_operand.vmem [shape: f32[1,640], index: 2, kind: input, shape index: {}]
  %s3 = inlined_call_operand.vmem [shape: f32[640,64], index: 3, kind: input, shape index: {}]
  %s4 = inlined_call_operand.vmem [shape: f32[1,64], index: 4, kind: input, shape index: {}]
  %s5 = inlined_call_operand.vmem [shape: f32[64,128], index: 5, kind: input, shape index: {}]
  %s6 = inlined_call_operand.vmem [shape: f32[1,128], index: 6, kind: input, shape index: {}]
  %s7 = inlined_call_operand.vmem [shape: f32[128,128], index: 7, kind: input, shape index: {}]
  %s8 = inlined_call_operand.vmem [shape: f32[1,128], index: 8, kind: input, shape index: {}]
  %s9 = inlined_call_operand.hbm [shape: f32[8,128], index: 9, kind: output, shape index: {}]
  %s10 = sld [smem:[#allocation0]]
  $region46: #{cnn_rnn_forward.1} parent=0
    _
  %s12 = ssub.s32 1, %s10
  %s13 = scalar_select 0, %s12, %s10
  $region1: #{cnn_rnn_forward.1} parent=0
    #allocation2 [shape = 'u8[4096]{0}', space=vmem, size = 0x1000, scoped, tag = 'output window, operand 0, single buffered']
    #allocation3 [shape = 's32[1]{0}', space=sflag, size = 0x4, scoped, tag = 'scoped memory for cnn_rnn_forward.1']
    %14 = vsyncpa [#allocation3], 0
    // Predicated region
    $region2: #{cnn_rnn_forward.1} parent=1 // pred_check
      _
    $region3: #{cnn_rnn_forward.1} parent=1 // pred_check_branch
      %16 = sbr.rel (0) target = $region5
    $region4: #{cnn_rnn_forward.1} parent=1 // pred_region
      _
    $region5: #{cnn_rnn_forward.1} parent=1 // pred_fallthru
      _
    // Predicated region
    $region6: #{cnn_rnn_forward.1} parent=1 // pred_check
      _
    $region7: #{cnn_rnn_forward.1} parent=1 // pred_check_branch
      %18 = sbr.rel (0) target = $region9
    $region8: #{cnn_rnn_forward.1} parent=1 // pred_region
      _
    $region9: #{cnn_rnn_forward.1} parent=1 // pred_fallthru
      _
    // Predicated region
    $region10: #{cnn_rnn_forward.1} parent=1 // pred_check
      _
    $region11: #{cnn_rnn_forward.1} parent=1 // pred_check_branch
      %20 = sbr.rel (0) target = $region13
    $region12: #{cnn_rnn_forward.1} parent=1 // pred_region
      _
    $region13: #{cnn_rnn_forward.1} parent=1 // pred_fallthru
      _
    // Predicated region
    $region14: #{cnn_rnn_forward.1} parent=1 // pred_check
      _
    $region15: #{cnn_rnn_forward.1} parent=1 // pred_check_branch
      %22 = sbr.rel (0) target = $region17
    $region16: #{cnn_rnn_forward.1} parent=1 // pred_region
      _
    $region17: #{cnn_rnn_forward.1} parent=1 // pred_fallthru
      _
    // Predicated region
    $region18: #{cnn_rnn_forward.1} parent=1 // pred_check
      _
    $region19: #{cnn_rnn_forward.1} parent=1 // pred_check_branch
      %24 = sbr.rel (0) target = $region21
    $region20: #{cnn_rnn_forward.1} parent=1 // pred_region
      _
    $region21: #{cnn_rnn_forward.1} parent=1 // pred_fallthru
      _
    // Predicated region
    $region22: #{cnn_rnn_forward.1} parent=1 // pred_check
      _
    $region23: #{cnn_rnn_forward.1} parent=1 // pred_check_branch
      %26 = sbr.rel (0) target = $region25
    $region24: #{cnn_rnn_forward.1} parent=1 // pred_region
      _
    $region25: #{cnn_rnn_forward.1} parent=1 // pred_fallthru
      _
    // Predicated region
    $region26: #{cnn_rnn_forward.1} parent=1 // pred_check
      _
    $region27: #{cnn_rnn_forward.1} parent=1 // pred_check_branch
      %28 = sbr.rel (0) target = $region29
    $region28: #{cnn_rnn_forward.1} parent=1 // pred_region
      _
    $region29: #{cnn_rnn_forward.1} parent=1 // pred_fallthru
      _
    // Predicated region
    $region30: #{cnn_rnn_forward.1} parent=1 // pred_check
      _
    $region31: #{cnn_rnn_forward.1} parent=1 // pred_check_branch
      %30 = sbr.rel (0) target = $region33
    $region32: #{cnn_rnn_forward.1} parent=1 // pred_region
      _
    $region33: #{cnn_rnn_forward.1} parent=1 // pred_fallthru
      _
    // Predicated region
    $region34: #{cnn_rnn_forward.1} parent=1 // pred_check
      _
    $region35: #{cnn_rnn_forward.1} parent=1 // pred_check_branch
      %32 = sbr.rel (0) target = $region37
    $region36: #{cnn_rnn_forward.1} parent=1 // pred_region
      _
    $region37: #{cnn_rnn_forward.1} parent=1 // pred_fallthru
      _
    %v33 = vld [vmem:[%s0] sm:$0xff]
    %v34 = vld [vmem:[%s1] sm:$0xff]
    %v35 = vld [vmem:[%s1 + $0x8] sm:$0xff]
    %v36 = vld [vmem:[%s1 + $0x10] sm:$0xff]
    %v37 = vld [vmem:[%s1 + $0x18] sm:$0xff]
    %v38 = vld [vmem:[%s1 + $0x20] sm:$0xff]
    %v39 = vld [vmem:[%s1 + $0x28] sm:$0xff]
    %v40 = vld [vmem:[%s1 + $0x30] sm:$0xff]
    %v41 = vld [vmem:[%s1 + $0x38] sm:$0xff]
    %v42 = vld [vmem:[%s1 + $0x40] sm:$0xff]
    %v43 = vld [vmem:[%s1 + $0x48] sm:$0xff]
    %v44 = vld [vmem:[%s1 + $0x50] sm:$0xff]
    %v45 = vld [vmem:[%s1 + $0x58] sm:$0xff]
    %v46 = vld [vmem:[%s1 + $0x60] sm:$0xff]
    %v47 = vld [vmem:[%s1 + $0x68] sm:$0xff]
    %v48 = vld [vmem:[%s1 + $0x70] sm:$0xff]
    %v49 = vld [vmem:[%s1 + $0x78] sm:$0xff]
    %v50 = vld [vmem:[%s1 + $0x80] sm:$0xff]
    %v51 = vld [vmem:[%s1 + $0x88] sm:$0xff]
    %v52 = vld [vmem:[%s1 + $0x90] sm:$0xff]
    %v53 = vld [vmem:[%s1 + $0x98] sm:$0xff]
    %v54 = vld [vmem:[%s1 + $0xa0] sm:$0xff]
    %v55 = vld [vmem:[%s1 + $0xa8] sm:$0xff]
    %v56 = vld [vmem:[%s1 + $0xb0] sm:$0xff]
    %v57 = vld [vmem:[%s1 + $0xb8] sm:$0xff]
    %v58 = vld [vmem:[%s1 + $0xc0] sm:$0xff]
    %v59 = vld [vmem:[%s1 + $0xc8] sm:$0xff]
    %v60 = vld [vmem:[%s1 + $0xd0] sm:$0xff]
    %v61 = vld [vmem:[%s1 + $0xd8] sm:$0xff]
    %v62 = vld [vmem:[%s1 + $0xe0] sm:$0xff]
    %v63 = vld [vmem:[%s1 + $0xe8] sm:$0xff]
    %v64 = vld [vmem:[%s1 + $0xf0] sm:$0xff]
    %v65 = vld [vmem:[%s1 + $0xf8] sm:$0xff]
    %v66 = vld [vmem:[%s1 + $0x100] sm:$0xff]
    %v67 = vld [vmem:[%s1 + $0x108] sm:$0xff]
    %v68 = vld [vmem:[%s1 + $0x110] sm:$0xff]
    %v69 = vld [vmem:[%s1 + $0x118] sm:$0xff]
    %v70 = vld [vmem:[%s1 + $0x120] sm:$0xff]
    %v71 = vld [vmem:[%s1 + $0x128] sm:$0xff]
    %v72 = vld [vmem:[%s1 + $0x130] sm:$0xff]
    %v73 = vld [vmem:[%s1 + $0x138] sm:$0xff]
    %v74 = vld [vmem:[%s1 + $0x140] sm:$0xff]
    %v75 = vld [vmem:[%s1 + $0x148] sm:$0xff]
    %v76 = vld [vmem:[%s1 + $0x150] sm:$0xff]
    %v77 = vld [vmem:[%s1 + $0x158] sm:$0xff]
    %v78 = vld [vmem:[%s1 + $0x160] sm:$0xff]
    %v79 = vld [vmem:[%s1 + $0x168] sm:$0xff]
    %v80 = vld [vmem:[%s1 + $0x170] sm:$0xff]
    %v81 = vld [vmem:[%s1 + $0x178] sm:$0xff]
    %v82 = vld [vmem:[%s1 + $0x180] sm:$0xff]
    %v83 = vld [vmem:[%s1 + $0x188] sm:$0xff]
    %vm84 = vcmask 326656
    %v86 = vsel %vm84, %v33, 0
    %88 = vmatprep.subr.mxu0 0.0
    %89 = vmatpush1.msra.mxu0 0.0
    %90 = vmatprep.subr.mxu0 0.0
    %91 = vmatpush1.msra.mxu0 0.0
    %92 = vmatprep.subr.mxu0 0.0
    %93 = vmatpush1.msra.mxu0 0.0
    %94 = vmatprep.subr.mxu0 0.0
    %95 = vmatpush1.msra.mxu0 0.0
    %96 = vmatprep.subr.mxu0 0.0
    %97 = vmatpush1.msra.mxu0 0.0
    %98 = vmatprep.subr.mxu0 0.0
    %99 = vmatpush1.msra.mxu0 0.0
    %100 = vmatprep.subr.mxu0 0.0
    %101 = vmatpush1.msra.mxu0 0.0
    %102 = vmatprep.subr.mxu0 0.0
    %103 = vmatpush1.msra.mxu0 0.0
    %104 = vmatprep.subr.mxu0 0.0
    %105 = vmatpush1.msra.mxu0 0.0
    %106 = vmatprep.subr.mxu0 0.0
    %107 = vmatpush1.msra.mxu0 0.0
    %108 = vmatprep.subr.mxu0 0.0
    %109 = vmatpush1.msra.mxu0 0.0
    %110 = vmatprep.subr.mxu0 %v75
    %111 = vmatpush1.msra.mxu0 %v74
    %112 = vmatprep.subr.mxu0 %v65
    %113 = vmatpush1.msra.mxu0 %v64
    %114 = vmatprep.subr.mxu0 %v55
    %115 = vmatpush1.msra.mxu0 %v54
    %116 = vmatprep.subr.mxu0 %v45
    %117 = vmatpush1.msra.mxu0 %v44
    %118 = vmatprep.subr.mxu0 %v35
    %119 = vmatpush1.msra.mxu0 %v34
    %120 = vmatprep.subr.mxu0 0.0
    %121 = vmatpush2.msra.mxu0 0.0
    %122 = vmatprep.subr.mxu0 0.0
    %123 = vmatpush2.msra.mxu0 0.0
    %124 = vmatprep.subr.mxu0 0.0
    %125 = vmatpush2.msra.mxu0 0.0
    %126 = vmatprep.subr.mxu0 0.0
    %127 = vmatpush2.msra.mxu0 0.0
    %128 = vmatprep.subr.mxu0 0.0
    %129 = vmatpush2.msra.mxu0 0.0
    %130 = vmatprep.subr.mxu0 0.0
    %131 = vmatpush2.msra.mxu0 0.0
    %132 = vmatprep.subr.mxu0 0.0
    %133 = vmatpush2.msra.mxu0 0.0
    %134 = vmatprep.subr.mxu0 0.0
    %135 = vmatpush2.msra.mxu0 0.0
    %136 = vmatprep.subr.mxu0 0.0
    %137 = vmatpush2.msra.mxu0 0.0
    %138 = vmatprep.subr.mxu0 0.0
    %139 = vmatpush2.msra.mxu0 0.0
    %140 = vmatprep.subr.mxu0 0.0
    %141 = vmatpush2.msra.mxu0 0.0
    %142 = vmatprep.subr.mxu0 0.0
    %143 = vmatpush2.msra.mxu0 0.0
    %144 = vmatprep.subr.mxu0 0.0
    %145 = vmatpush2.msra.mxu0 0.0
    %146 = vmatprep.subr.mxu0 0.0
    %147 = vmatpush2.msra.mxu0 0.0
    %148 = vmatprep.subr.mxu0 0.0
    %149 = vmatpush2.msra.mxu0 0.0
    %150 = vmatprep.subr.mxu0 0.0
    %151 = vmatpush2.msra.mxu0 0.0
    %152 = vmatprep.mubr.f32.mxu0 0.0
    %153 = vmatmul.mubr.f32.gmra.mxu0 %v86
    %v154 = vpop.f32.mrf.mxu0
    %v155 = vadd.f32 0.0, %v154
    %v156 = vpop.f32.mrf.mxu0
    %v157 = vadd.f32 0.0, %v156
    %158 = vdwg.mxu0
    %159 = vmatprep.subr.mxu0 0.0
    %160 = vmatpush1.msra.mxu0 0.0
    %161 = vmatprep.subr.mxu0 0.0
    %162 = vmatpush1.msra.mxu0 0.0
    %163 = vmatprep.subr.mxu0 0.0
    %164 = vmatpush1.msra.mxu0 0.0
    %165 = vmatprep.subr.mxu0 0.0
    %166 = vmatpush1.msra.mxu0 0.0
    %167 = vmatprep.subr.mxu0 0.0
    %168 = vmatpush1.msra.mxu0 0.0
    %169 = vmatprep.subr.mxu0 0.0
    %170 = vmatpush1.msra.mxu0 0.0
    %171 = vmatprep.subr.mxu0 0.0
    %172 = vmatpush1.msra.mxu0 0.0
    %173 = vmatprep.subr.mxu0 0.0
    %174 = vmatpush1.msra.mxu0 0.0
    %175 = vmatprep.subr.mxu0 0.0
    %176 = vmatpush1.msra.mxu0 0.0
    %177 = vmatprep.subr.mxu0 0.0
    %178 = vmatpush1.msra.mxu0 0.0
    %179 = vmatprep.subr.mxu0 0.0
    %180 = vmatpush1.msra.mxu0 0.0
    %181 = vmatprep.subr.mxu0 %v77
    %182 = vmatpush1.msra.mxu0 %v76
    %183 = vmatprep.subr.mxu0 %v67
    %184 = vmatpush1.msra.mxu0 %v66
    %185 = vmatprep.subr.mxu0 %v57
    %186 = vmatpush1.msra.mxu0 %v56
    %187 = vmatprep.subr.mxu0 %v47
    %188 = vmatpush1.msra.mxu0 %v46
    %189 = vmatprep.subr.mxu0 %v37
    %190 = vmatpush1.msra.mxu0 %v36
    %191 = vmatprep.subr.mxu0 0.0
    %192 = vmatpush2.msra.mxu0 0.0
    %193 = vmatprep.subr.mxu0 0.0
    %194 = vmatpush2.msra.mxu0 0.0
    %195 = vmatprep.subr.mxu0 0.0
    %196 = vmatpush2.msra.mxu0 0.0
    %197 = vmatprep.subr.mxu0 0.0
    %198 = vmatpush2.msra.mxu0 0.0
    %199 = vmatprep.subr.mxu0 0.0
    %200 = vmatpush2.msra.mxu0 0.0
    %201 = vmatprep.subr.mxu0 0.0
    %202 = vmatpush2.msra.mxu0 0.0
    %203 = vmatprep.subr.mxu0 0.0
    %204 = vmatpush2.msra.mxu0 0.0
    %205 = vmatprep.subr.mxu0 0.0
    %206 = vmatpush2.msra.mxu0 0.0
    %207 = vmatprep.subr.mxu0 0.0
    %208 = vmatpush2.msra.mxu0 0.0
    %209 = vmatprep.subr.mxu0 0.0
    %210 = vmatpush2.msra.mxu0 0.0
    %211 = vmatprep.subr.mxu0 0.0
    %212 = vmatpush2.msra.mxu0 0.0
    %213 = vmatprep.subr.mxu0 0.0
    %214 = vmatpush2.msra.mxu0 0.0
    %215 = vmatprep.subr.mxu0 0.0
    %216 = vmatpush2.msra.mxu0 0.0
    %217 = vmatprep.subr.mxu0 0.0
    %218 = vmatpush2.msra.mxu0 0.0
    %219 = vmatprep.subr.mxu0 0.0
    %220 = vmatpush2.msra.mxu0 0.0
    %221 = vmatprep.subr.mxu0 0.0
    %222 = vmatpush2.msra.mxu0 0.0
    %223 = vmatprep.mubr.f32.mxu0 0.0
    %224 = vmatmul.mubr.f32.gmra.mxu0 %v86
    %v225 = vpop.f32.mrf.mxu0
    %v226 = vadd.f32 0.0, %v225
    %v227 = vpop.f32.mrf.mxu0
    %v228 = vadd.f32 0.0, %v227
    %229 = vdwg.mxu0
    %230 = vmatprep.subr.mxu0 0.0
    %231 = vmatpush1.msra.mxu0 0.0
    %232 = vmatprep.subr.mxu0 0.0
    %233 = vmatpush1.msra.mxu0 0.0
    %234 = vmatprep.subr.mxu0 0.0
    %235 = vmatpush1.msra.mxu0 0.0
    %236 = vmatprep.subr.mxu0 0.0
    %237 = vmatpush1.msra.mxu0 0.0
    %238 = vmatprep.subr.mxu0 0.0
    %239 = vmatpush1.msra.mxu0 0.0
    %240 = vmatprep.subr.mxu0 0.0
    %241 = vmatpush1.msra.mxu0 0.0
    %242 = vmatprep.subr.mxu0 0.0
    %243 = vmatpush1.msra.mxu0 0.0
    %244 = vmatprep.subr.mxu0 0.0
    %245 = vmatpush1.msra.mxu0 0.0
    %246 = vmatprep.subr.mxu0 0.0
    %247 = vmatpush1.msra.mxu0 0.0
    %248 = vmatprep.subr.mxu0 0.0
    %249 = vmatpush1.msra.mxu0 0.0
    %250 = vmatprep.subr.mxu0 0.0
    %251 = vmatpush1.msra.mxu0 0.0
    %252 = vmatprep.subr.mxu0 %v79
    %253 = vmatpush1.msra.mxu0 %v78
    %254 = vmatprep.subr.mxu0 %v69
    %255 = vmatpush1.msra.mxu0 %v68
    %256 = vmatprep.subr.mxu0 %v59
    %257 = vmatpush1.msra.mxu0 %v58
    %258 = vmatprep.subr.mxu0 %v49
    %259 = vmatpush1.msra.mxu0 %v48
    %260 = vmatprep.subr.mxu0 %v39
    %261 = vmatpush1.msra.mxu0 %v38
    %262 = vmatprep.subr.mxu0 0.0
    %263 = vmatpush2.msra.mxu0 0.0
    %264 = vmatprep.subr.mxu0 0.0
    %265 = vmatpush2.msra.mxu0 0.0
    %266 = vmatprep.subr.mxu0 0.0
    %267 = vmatpush2.msra.mxu0 0.0
    %268 = vmatprep.subr.mxu0 0.0
    %269 = vmatpush2.msra.mxu0 0.0
    %270 = vmatprep.subr.mxu0 0.0
    %271 = vmatpush2.msra.mxu0 0.0
    %272 = vmatprep.subr.mxu0 0.0
    %273 = vmatpush2.msra.mxu0 0.0
    %274 = vmatprep.subr.mxu0 0.0
    %275 = vmatpush2.msra.mxu0 0.0
    %276 = vmatprep.subr.mxu0 0.0
    %277 = vmatpush2.msra.mxu0 0.0
    %278 = vmatprep.subr.mxu0 0.0
    %279 = vmatpush2.msra.mxu0 0.0
    %280 = vmatprep.subr.mxu0 0.0
    %281 = vmatpush2.msra.mxu0 0.0
    %282 = vmatprep.subr.mxu0 0.0
    %283 = vmatpush2.msra.mxu0 0.0
    %284 = vmatprep.subr.mxu0 0.0
    %285 = vmatpush2.msra.mxu0 0.0
    %286 = vmatprep.subr.mxu0 0.0
    %287 = vmatpush2.msra.mxu0 0.0
    %288 = vmatprep.subr.mxu0 0.0
    %289 = vmatpush2.msra.mxu0 0.0
    %290 = vmatprep.subr.mxu0 0.0
    %291 = vmatpush2.msra.mxu0 0.0
    %292 = vmatprep.subr.mxu0 0.0
    %293 = vmatpush2.msra.mxu0 0.0
    %294 = vmatprep.mubr.f32.mxu0 0.0
    %295 = vmatmul.mubr.f32.gmra.mxu0 %v86
    %v296 = vpop.f32.mrf.mxu0
    %v297 = vadd.f32 0.0, %v296
    %v298 = vpop.f32.mrf.mxu0
    %v299 = vadd.f32 0.0, %v298
    %300 = vdwg.mxu0
    %301 = vmatprep.subr.mxu0 0.0
    %302 = vmatpush1.msra.mxu0 0.0
    %303 = vmatprep.subr.mxu0 0.0
    %304 = vmatpush1.msra.mxu0 0.0
    %305 = vmatprep.subr.mxu0 0.0
    %306 = vmatpush1.msra.mxu0 0.0
    %307 = vmatprep.subr.mxu0 0.0
    %308 = vmatpush1.msra.mxu0 0.0
    %309 = vmatprep.subr.mxu0 0.0
    %310 = vmatpush1.msra.mxu0 0.0
    %311 = vmatprep.subr.mxu0 0.0
    %312 = vmatpush1.msra.mxu0 0.0
    %313 = vmatprep.subr.mxu0 0.0
    %314 = vmatpush1.msra.mxu0 0.0
    %315 = vmatprep.subr.mxu0 0.0
    %316 = vmatpush1.msra.mxu0 0.0
    %317 = vmatprep.subr.mxu0 0.0
    %318 = vmatpush1.msra.mxu0 0.0
    %319 = vmatprep.subr.mxu0 0.0
    %320 = vmatpush1.msra.mxu0 0.0
    %321 = vmatprep.subr.mxu0 0.0
    %322 = vmatpush1.msra.mxu0 0.0
    %323 = vmatprep.subr.mxu0 %v81
    %324 = vmatpush1.msra.mxu0 %v80
    %325 = vmatprep.subr.mxu0 %v71
    %326 = vmatpush1.msra.mxu0 %v70
    %327 = vmatprep.subr.mxu0 %v61
    %328 = vmatpush1.msra.mxu0 %v60
    %329 = vmatprep.subr.mxu0 %v51
    %330 = vmatpush1.msra.mxu0 %v50
    %331 = vmatprep.subr.mxu0 %v41
    %332 = vmatpush1.msra.mxu0 %v40
    %333 = vmatprep.subr.mxu0 0.0
    %334 = vmatpush2.msra.mxu0 0.0
    %335 = vmatprep.subr.mxu0 0.0
    %336 = vmatpush2.msra.mxu0 0.0
    %337 = vmatprep.subr.mxu0 0.0
    %338 = vmatpush2.msra.mxu0 0.0
    %339 = vmatprep.subr.mxu0 0.0
    %340 = vmatpush2.msra.mxu0 0.0
    %341 = vmatprep.subr.mxu0 0.0
    %342 = vmatpush2.msra.mxu0 0.0
    %343 = vmatprep.subr.mxu0 0.0
    %344 = vmatpush2.msra.mxu0 0.0
    %345 = vmatprep.subr.mxu0 0.0
    %346 = vmatpush2.msra.mxu0 0.0
    %347 = vmatprep.subr.mxu0 0.0
    %348 = vmatpush2.msra.mxu0 0.0
    %349 = vmatprep.subr.mxu0 0.0
    %350 = vmatpush2.msra.mxu0 0.0
    %351 = vmatprep.subr.mxu0 0.0
    %352 = vmatpush2.msra.mxu0 0.0
    %353 = vmatprep.subr.mxu0 0.0
    %354 = vmatpush2.msra.mxu0 0.0
    %355 = vmatprep.subr.mxu0 0.0
    %356 = vmatpush2.msra.mxu0 0.0
    %357 = vmatprep.subr.mxu0 0.0
    %358 = vmatpush2.msra.mxu0 0.0
    %359 = vmatprep.subr.mxu0 0.0
    %360 = vmatpush2.msra.mxu0 0.0
    %361 = vmatprep.subr.mxu0 0.0
    %362 = vmatpush2.msra.mxu0 0.0
    %363 = vmatprep.subr.mxu0 0.0
    %364 = vmatpush2.msra.mxu0 0.0
    %365 = vmatprep.mubr.f32.mxu0 0.0
    %366 = vmatmul.mubr.f32.gmra.mxu0 %v86
    %v367 = vpop.f32.mrf.mxu0
    %v368 = vadd.f32 0.0, %v367
    %v369 = vpop.f32.mrf.mxu0
    %v370 = vadd.f32 0.0, %v369
    %371 = vdwg.mxu0
    %372 = vmatprep.subr.mxu0 0.0
    %373 = vmatpush1.msra.mxu0 0.0
    %374 = vmatprep.subr.mxu0 0.0
    %375 = vmatpush1.msra.mxu0 0.0
    %376 = vmatprep.subr.mxu0 0.0
    %377 = vmatpush1.msra.mxu0 0.0
    %378 = vmatprep.subr.mxu0 0.0
    %379 = vmatpush1.msra.mxu0 0.0
    %380 = vmatprep.subr.mxu0 0.0
    %381 = vmatpush1.msra.mxu0 0.0
    %382 = vmatprep.subr.mxu0 0.0
    %383 = vmatpush1.msra.mxu0 0.0
    %384 = vmatprep.subr.mxu0 0.0
    %385 = vmatpush1.msra.mxu0 0.0
    %386 = vmatprep.subr.mxu0 0.0
    %387 = vmatpush1.msra.mxu0 0.0
    %388 = vmatprep.subr.mxu0 0.0
    %389 = vmatpush1.msra.mxu0 0.0
    %390 = vmatprep.subr.mxu0 0.0
    %391 = vmatpush1.msra.mxu0 0.0
    %392 = vmatprep.subr.mxu0 0.0
    %393 = vmatpush1.msra.mxu0 0.0
    %394 = vmatprep.subr.mxu0 %v83
    %395 = vmatpush1.msra.mxu0 %v82
    %396 = vmatprep.subr.mxu0 %v73
    %397 = vmatpush1.msra.mxu0 %v72
    %398 = vmatprep.subr.mxu0 %v63
    %399 = vmatpush1.msra.mxu0 %v62
    %400 = vmatprep.subr.mxu0 %v53
    %401 = vmatpush1.msra.mxu0 %v52
    %402 = vmatprep.subr.mxu0 %v43
    %403 = vmatpush1.msra.mxu0 %v42
    %404 = vmatprep.subr.mxu0 0.0
    %405 = vmatpush2.msra.mxu0 0.0
    %406 = vmatprep.subr.mxu0 0.0
    %407 = vmatpush2.msra.mxu0 0.0
    %408 = vmatprep.subr.mxu0 0.0
    %409 = vmatpush2.msra.mxu0 0.0
    %410 = vmatprep.subr.mxu0 0.0
    %411 = vmatpush2.msra.mxu0 0.0
    %412 = vmatprep.subr.mxu0 0.0
    %413 = vmatpush2.msra.mxu0 0.0
    %414 = vmatprep.subr.mxu0 0.0
    %415 = vmatpush2.msra.mxu0 0.0
    %416 = vmatprep.subr.mxu0 0.0
    %417 = vmatpush2.msra.mxu0 0.0
    %418 = vmatprep.subr.mxu0 0.0
    %419 = vmatpush2.msra.mxu0 0.0
    %420 = vmatprep.subr.mxu0 0.0
    %421 = vmatpush2.msra.mxu0 0.0
    %422 = vmatprep.subr.mxu0 0.0
    %423 = vmatpush2.msra.mxu0 0.0
    %424 = vmatprep.subr.mxu0 0.0
    %425 = vmatpush2.msra.mxu0 0.0
    %426 = vmatprep.subr.mxu0 0.0
    %427 = vmatpush2.msra.mxu0 0.0
    %428 = vmatprep.subr.mxu0 0.0
    %429 = vmatpush2.msra.mxu0 0.0
    %430 = vmatprep.subr.mxu0 0.0
    %431 = vmatpush2.msra.mxu0 0.0
    %432 = vmatprep.subr.mxu0 0.0
    %433 = vmatpush2.msra.mxu0 0.0
    %434 = vmatprep.subr.mxu0 0.0
    %435 = vmatpush2.msra.mxu0 0.0
    %436 = vmatprep.mubr.f32.mxu0 0.0
    %437 = vmatmul.mubr.f32.gmra.mxu0 %v86
    %v438 = vpop.f32.mrf.mxu0
    %v439 = vadd.f32 0.0, %v438
    %v440 = vpop.f32.mrf.mxu0
    %v441 = vadd.f32 0.0, %v440
    %442 = vdwg.mxu0
    %v443 = vmax.f32 %v155, %v299
    %v444 = vmax.f32 %v157, %v368
    %v445 = vmax.f32 %v226, %v370
    %v446 = vmax.f32 %v228, %v439
    %v447 = vmax.f32 %v297, %v441
    %v448 = vld [vmem:[%s2] sm:$0x1f]
    %v450 = vlaneseq
    %v451 = vshrl.u32 %v450, 7
    %v452 = vsub.s32 0, %v451
    %v453 = vrot.slane %v448, %v452
    %v454 = vlaneseq
    %v455 = vshrl.u32 %v454, 7
    %v456 = vsub.s32 1, %v455
    %v457 = vrot.slane %v448, %v456
    %v458 = vlaneseq
    %v459 = vshrl.u32 %v458, 7
    %v460 = vsub.s32 2, %v459
    %v461 = vrot.slane %v448, %v460
    %v462 = vlaneseq
    %v463 = vshrl.u32 %v462, 7
    %v464 = vsub.s32 3, %v463
    %v465 = vrot.slane %v448, %v464
    %v466 = vlaneseq
    %v467 = vshrl.u32 %v466, 7
    %v468 = vsub.s32 4, %v467
    %v469 = vrot.slane %v448, %v468
    %v475 = vadd.f32 %v443, %v453
    %v476 = vadd.f32 %v444, %v457
    %v477 = vadd.f32 %v445, %v461
    %v478 = vadd.f32 %v446, %v465
    %v479 = vadd.f32 %v447, %v469
    %v480 = vmax.f32 %v475, 0.0
    %v481 = vmax.f32 %v476, 0.0
    %v482 = vmax.f32 %v477, 0.0
    %v483 = vmax.f32 %v478, 0.0
    %v484 = vmax.f32 %v479, 0.0
    %v485 = vld [vmem:[%s3] sm:$0xff]
    %v486 = vld [vmem:[%s3 + $0x8] sm:$0xff]
    %v487 = vld [vmem:[%s3 + $0x10] sm:$0xff]
    %v488 = vld [vmem:[%s3 + $0x18] sm:$0xff]
    %v489 = vld [vmem:[%s3 + $0x20] sm:$0xff]
    %v490 = vld [vmem:[%s3 + $0x28] sm:$0xff]
    %v491 = vld [vmem:[%s3 + $0x30] sm:$0xff]
    %v492 = vld [vmem:[%s3 + $0x38] sm:$0xff]
    %v493 = vld [vmem:[%s3 + $0x40] sm:$0xff]
    %v494 = vld [vmem:[%s3 + $0x48] sm:$0xff]
    %v495 = vld [vmem:[%s3 + $0x50] sm:$0xff]
    %v496 = vld [vmem:[%s3 + $0x58] sm:$0xff]
    %v497 = vld [vmem:[%s3 + $0x60] sm:$0xff]
    %v498 = vld [vmem:[%s3 + $0x68] sm:$0xff]
    %v499 = vld [vmem:[%s3 + $0x70] sm:$0xff]
    %v500 = vld [vmem:[%s3 + $0x78] sm:$0xff]
    %v501 = vld [vmem:[%s3 + $0x80] sm:$0xff]
    %v502 = vld [vmem:[%s3 + $0x88] sm:$0xff]
    %v503 = vld [vmem:[%s3 + $0x90] sm:$0xff]
    %v504 = vld [vmem:[%s3 + $0x98] sm:$0xff]
    %v505 = vld [vmem:[%s3 + $0xa0] sm:$0xff]
    %v506 = vld [vmem:[%s3 + $0xa8] sm:$0xff]
    %v507 = vld [vmem:[%s3 + $0xb0] sm:$0xff]
    %v508 = vld [vmem:[%s3 + $0xb8] sm:$0xff]
    %v509 = vld [vmem:[%s3 + $0xc0] sm:$0xff]
    %v510 = vld [vmem:[%s3 + $0xc8] sm:$0xff]
    %v511 = vld [vmem:[%s3 + $0xd0] sm:$0xff]
    %v512 = vld [vmem:[%s3 + $0xd8] sm:$0xff]
    %v513 = vld [vmem:[%s3 + $0xe0] sm:$0xff]
    %v514 = vld [vmem:[%s3 + $0xe8] sm:$0xff]
    %v515 = vld [vmem:[%s3 + $0xf0] sm:$0xff]
    %v516 = vld [vmem:[%s3 + $0xf8] sm:$0xff]
    %v517 = vld [vmem:[%s3 + $0x100] sm:$0xff]
    %v518 = vld [vmem:[%s3 + $0x108] sm:$0xff]
    %v519 = vld [vmem:[%s3 + $0x110] sm:$0xff]
    %v520 = vld [vmem:[%s3 + $0x118] sm:$0xff]
    %v521 = vld [vmem:[%s3 + $0x120] sm:$0xff]
    %v522 = vld [vmem:[%s3 + $0x128] sm:$0xff]
    %v523 = vld [vmem:[%s3 + $0x130] sm:$0xff]
    %v524 = vld [vmem:[%s3 + $0x138] sm:$0xff]
    %v525 = vld [vmem:[%s3 + $0x140] sm:$0xff]
    %v526 = vld [vmem:[%s3 + $0x148] sm:$0xff]
    %v527 = vld [vmem:[%s3 + $0x150] sm:$0xff]
    %v528 = vld [vmem:[%s3 + $0x158] sm:$0xff]
    %v529 = vld [vmem:[%s3 + $0x160] sm:$0xff]
    %v530 = vld [vmem:[%s3 + $0x168] sm:$0xff]
    %v531 = vld [vmem:[%s3 + $0x170] sm:$0xff]
    %v532 = vld [vmem:[%s3 + $0x178] sm:$0xff]
    %v533 = vld [vmem:[%s3 + $0x180] sm:$0xff]
    %v534 = vld [vmem:[%s3 + $0x188] sm:$0xff]
    %v535 = vld [vmem:[%s3 + $0x190] sm:$0xff]
    %v536 = vld [vmem:[%s3 + $0x198] sm:$0xff]
    %v537 = vld [vmem:[%s3 + $0x1a0] sm:$0xff]
    %v538 = vld [vmem:[%s3 + $0x1a8] sm:$0xff]
    %v539 = vld [vmem:[%s3 + $0x1b0] sm:$0xff]
    %v540 = vld [vmem:[%s3 + $0x1b8] sm:$0xff]
    %v541 = vld [vmem:[%s3 + $0x1c0] sm:$0xff]
    %v542 = vld [vmem:[%s3 + $0x1c8] sm:$0xff]
    %v543 = vld [vmem:[%s3 + $0x1d0] sm:$0xff]
    %v544 = vld [vmem:[%s3 + $0x1d8] sm:$0xff]
    %v545 = vld [vmem:[%s3 + $0x1e0] sm:$0xff]
    %v546 = vld [vmem:[%s3 + $0x1e8] sm:$0xff]
    %v547 = vld [vmem:[%s3 + $0x1f0] sm:$0xff]
    %v548 = vld [vmem:[%s3 + $0x1f8] sm:$0xff]
    %v549 = vld [vmem:[%s3 + $0x200] sm:$0xff]
    %v550 = vld [vmem:[%s3 + $0x208] sm:$0xff]
    %v551 = vld [vmem:[%s3 + $0x210] sm:$0xff]
    %v552 = vld [vmem:[%s3 + $0x218] sm:$0xff]
    %v553 = vld [vmem:[%s3 + $0x220] sm:$0xff]
    %v554 = vld [vmem:[%s3 + $0x228] sm:$0xff]
    %v555 = vld [vmem:[%s3 + $0x230] sm:$0xff]
    %v556 = vld [vmem:[%s3 + $0x238] sm:$0xff]
    %v557 = vld [vmem:[%s3 + $0x240] sm:$0xff]
    %v558 = vld [vmem:[%s3 + $0x248] sm:$0xff]
    %v559 = vld [vmem:[%s3 + $0x250] sm:$0xff]
    %v560 = vld [vmem:[%s3 + $0x258] sm:$0xff]
    %v561 = vld [vmem:[%s3 + $0x260] sm:$0xff]
    %v562 = vld [vmem:[%s3 + $0x268] sm:$0xff]
    %v563 = vld [vmem:[%s3 + $0x270] sm:$0xff]
    %v564 = vld [vmem:[%s3 + $0x278] sm:$0xff]
    %v565 = vld [vmem:[%s4] sm:$0x1]
    %v567 = vlaneseq
    %v568 = vshrl.u32 %v567, 7
    %v569 = vsub.s32 0, %v568
    %v570 = vrot.slane %v565, %v569
    %572 = vmatprep.subr.mxu0 0.0
    %573 = vmatpush1.msra.mxu0 %v500
    %574 = vmatprep.subr.mxu0 0.0
    %575 = vmatpush1.msra.mxu0 %v499
    %576 = vmatprep.subr.mxu0 0.0
    %577 = vmatpush1.msra.mxu0 %v498
    %578 = vmatprep.subr.mxu0 0.0
    %579 = vmatpush1.msra.mxu0 %v497
    %580 = vmatprep.subr.mxu0 0.0
    %581 = vmatpush1.msra.mxu0 %v496
    %582 = vmatprep.subr.mxu0 0.0
    %583 = vmatpush1.msra.mxu0 %v495
    %584 = vmatprep.subr.mxu0 0.0
    %585 = vmatpush1.msra.mxu0 %v494
    %586 = vmatprep.subr.mxu0 0.0
    %587 = vmatpush1.msra.mxu0 %v493
    %588 = vmatprep.subr.mxu0 0.0
    %589 = vmatpush1.msra.mxu0 %v492
    %590 = vmatprep.subr.mxu0 0.0
    %591 = vmatpush1.msra.mxu0 %v491
    %592 = vmatprep.subr.mxu0 0.0
    %593 = vmatpush1.msra.mxu0 %v490
    %594 = vmatprep.subr.mxu0 0.0
    %595 = vmatpush1.msra.mxu0 %v489
    %596 = vmatprep.subr.mxu0 0.0
    %597 = vmatpush1.msra.mxu0 %v488
    %598 = vmatprep.subr.mxu0 0.0
    %599 = vmatpush1.msra.mxu0 %v487
    %600 = vmatprep.subr.mxu0 0.0
    %601 = vmatpush1.msra.mxu0 %v486
    %602 = vmatprep.subr.mxu0 0.0
    %603 = vmatpush1.msra.mxu0 %v485
    %604 = vmatprep.subr.mxu0 0.0
    %605 = vmatpush2.msra.mxu0 %v516
    %606 = vmatprep.subr.mxu0 0.0
    %607 = vmatpush2.msra.mxu0 %v515
    %608 = vmatprep.subr.mxu0 0.0
    %609 = vmatpush2.msra.mxu0 %v514
    %610 = vmatprep.subr.mxu0 0.0
    %611 = vmatpush2.msra.mxu0 %v513
    %612 = vmatprep.subr.mxu0 0.0
    %613 = vmatpush2.msra.mxu0 %v512
    %614 = vmatprep.subr.mxu0 0.0
    %615 = vmatpush2.msra.mxu0 %v511
    %616 = vmatprep.subr.mxu0 0.0
    %617 = vmatpush2.msra.mxu0 %v510
    %618 = vmatprep.subr.mxu0 0.0
    %619 = vmatpush2.msra.mxu0 %v509
    %620 = vmatprep.subr.mxu0 0.0
    %621 = vmatpush2.msra.mxu0 %v508
    %622 = vmatprep.subr.mxu0 0.0
    %623 = vmatpush2.msra.mxu0 %v507
    %624 = vmatprep.subr.mxu0 0.0
    %625 = vmatpush2.msra.mxu0 %v506
    %626 = vmatprep.subr.mxu0 0.0
    %627 = vmatpush2.msra.mxu0 %v505
    %628 = vmatprep.subr.mxu0 0.0
    %629 = vmatpush2.msra.mxu0 %v504
    %630 = vmatprep.subr.mxu0 0.0
    %631 = vmatpush2.msra.mxu0 %v503
    %632 = vmatprep.subr.mxu0 0.0
    %633 = vmatpush2.msra.mxu0 %v502
    %634 = vmatprep.subr.mxu0 0.0
    %635 = vmatpush2.msra.mxu0 %v501
    %636 = vmatprep.mubr.f32.mxu0 %v481
    %637 = vmatmul.mubr.f32.gmra.mxu0 %v480
    %v638 = vpop.f32.mrf.mxu0
    %v639 = vadd.f32 %v570, %v638
    %v640 = vpop.f32.mrf.mxu0
    %641 = vdwg.mxu0
    %642 = vmatprep.subr.mxu0 0.0
    %643 = vmatpush1.msra.mxu0 %v532
    %644 = vmatprep.subr.mxu0 0.0
    %645 = vmatpush1.msra.mxu0 %v531
    %646 = vmatprep.subr.mxu0 0.0
    %647 = vmatpush1.msra.mxu0 %v530
    %648 = vmatprep.subr.mxu0 0.0
    %649 = vmatpush1.msra.mxu0 %v529
    %650 = vmatprep.subr.mxu0 0.0
    %651 = vmatpush1.msra.mxu0 %v528
    %652 = vmatprep.subr.mxu0 0.0
    %653 = vmatpush1.msra.mxu0 %v527
    %654 = vmatprep.subr.mxu0 0.0
    %655 = vmatpush1.msra.mxu0 %v526
    %656 = vmatprep.subr.mxu0 0.0
    %657 = vmatpush1.msra.mxu0 %v525
    %658 = vmatprep.subr.mxu0 0.0
    %659 = vmatpush1.msra.mxu0 %v524
    %660 = vmatprep.subr.mxu0 0.0
    %661 = vmatpush1.msra.mxu0 %v523
    %662 = vmatprep.subr.mxu0 0.0
    %663 = vmatpush1.msra.mxu0 %v522
    %664 = vmatprep.subr.mxu0 0.0
    %665 = vmatpush1.msra.mxu0 %v521
    %666 = vmatprep.subr.mxu0 0.0
    %667 = vmatpush1.msra.mxu0 %v520
    %668 = vmatprep.subr.mxu0 0.0
    %669 = vmatpush1.msra.mxu0 %v519
    %670 = vmatprep.subr.mxu0 0.0
    %671 = vmatpush1.msra.mxu0 %v518
    %672 = vmatprep.subr.mxu0 0.0
    %673 = vmatpush1.msra.mxu0 %v517
    %674 = vmatprep.subr.mxu0 0.0
    %675 = vmatpush2.msra.mxu0 %v548
    %676 = vmatprep.subr.mxu0 0.0
    %677 = vmatpush2.msra.mxu0 %v547
    %678 = vmatprep.subr.mxu0 0.0
    %679 = vmatpush2.msra.mxu0 %v546
    %680 = vmatprep.subr.mxu0 0.0
    %681 = vmatpush2.msra.mxu0 %v545
    %682 = vmatprep.subr.mxu0 0.0
    %683 = vmatpush2.msra.mxu0 %v544
    %684 = vmatprep.subr.mxu0 0.0
    %685 = vmatpush2.msra.mxu0 %v543
    %686 = vmatprep.subr.mxu0 0.0
    %687 = vmatpush2.msra.mxu0 %v542
    %688 = vmatprep.subr.mxu0 0.0
    %689 = vmatpush2.msra.mxu0 %v541
    %690 = vmatprep.subr.mxu0 0.0
    %691 = vmatpush2.msra.mxu0 %v540
    %692 = vmatprep.subr.mxu0 0.0
    %693 = vmatpush2.msra.mxu0 %v539
    %694 = vmatprep.subr.mxu0 0.0
    %695 = vmatpush2.msra.mxu0 %v538
    %696 = vmatprep.subr.mxu0 0.0
    %697 = vmatpush2.msra.mxu0 %v537
    %698 = vmatprep.subr.mxu0 0.0
    %699 = vmatpush2.msra.mxu0 %v536
    %700 = vmatprep.subr.mxu0 0.0
    %701 = vmatpush2.msra.mxu0 %v535
    %702 = vmatprep.subr.mxu0 0.0
    %703 = vmatpush2.msra.mxu0 %v534
    %704 = vmatprep.subr.mxu0 0.0
    %705 = vmatpush2.msra.mxu0 %v533
    %706 = vmatprep.mubr.f32.mxu0 %v483
    %707 = vmatmul.mubr.f32.gmra.mxu0 %v482
    %v708 = vpop.f32.mrf.mxu0
    %v709 = vadd.f32 %v639, %v708
    %v710 = vpop.f32.mrf.mxu0
    %711 = vdwg.mxu0
    %712 = vmatprep.subr.mxu0 0.0
    %713 = vmatpush1.msra.mxu0 %v564
    %714 = vmatprep.subr.mxu0 0.0
    %715 = vmatpush1.msra.mxu0 %v563
    %716 = vmatprep.subr.mxu0 0.0
    %717 = vmatpush1.msra.mxu0 %v562
    %718 = vmatprep.subr.mxu0 0.0
    %719 = vmatpush1.msra.mxu0 %v561
    %720 = vmatprep.subr.mxu0 0.0
    %721 = vmatpush1.msra.mxu0 %v560
    %722 = vmatprep.subr.mxu0 0.0
    %723 = vmatpush1.msra.mxu0 %v559
    %724 = vmatprep.subr.mxu0 0.0
    %725 = vmatpush1.msra.mxu0 %v558
    %726 = vmatprep.subr.mxu0 0.0
    %727 = vmatpush1.msra.mxu0 %v557
    %728 = vmatprep.subr.mxu0 0.0
    %729 = vmatpush1.msra.mxu0 %v556
    %730 = vmatprep.subr.mxu0 0.0
    %731 = vmatpush1.msra.mxu0 %v555
    %732 = vmatprep.subr.mxu0 0.0
    %733 = vmatpush1.msra.mxu0 %v554
    %734 = vmatprep.subr.mxu0 0.0
    %735 = vmatpush1.msra.mxu0 %v553
    %736 = vmatprep.subr.mxu0 0.0
    %737 = vmatpush1.msra.mxu0 %v552
    %738 = vmatprep.subr.mxu0 0.0
    %739 = vmatpush1.msra.mxu0 %v551
    %740 = vmatprep.subr.mxu0 0.0
    %741 = vmatpush1.msra.mxu0 %v550
    %742 = vmatprep.subr.mxu0 0.0
    %743 = vmatpush1.msra.mxu0 %v549
    %744 = vmatprep.subr.mxu0 0.0
    %745 = vmatpush2.msra.mxu0 0.0
    %746 = vmatprep.subr.mxu0 0.0
    %747 = vmatpush2.msra.mxu0 0.0
    %748 = vmatprep.subr.mxu0 0.0
    %749 = vmatpush2.msra.mxu0 0.0
    %750 = vmatprep.subr.mxu0 0.0
    %751 = vmatpush2.msra.mxu0 0.0
    %752 = vmatprep.subr.mxu0 0.0
    %753 = vmatpush2.msra.mxu0 0.0
    %754 = vmatprep.subr.mxu0 0.0
    %755 = vmatpush2.msra.mxu0 0.0
    %756 = vmatprep.subr.mxu0 0.0
    %757 = vmatpush2.msra.mxu0 0.0
    %758 = vmatprep.subr.mxu0 0.0
    %759 = vmatpush2.msra.mxu0 0.0
    %760 = vmatprep.subr.mxu0 0.0
    %761 = vmatpush2.msra.mxu0 0.0
    %762 = vmatprep.subr.mxu0 0.0
    %763 = vmatpush2.msra.mxu0 0.0
    %764 = vmatprep.subr.mxu0 0.0
    %765 = vmatpush2.msra.mxu0 0.0
    %766 = vmatprep.subr.mxu0 0.0
    %767 = vmatpush2.msra.mxu0 0.0
    %768 = vmatprep.subr.mxu0 0.0
    %769 = vmatpush2.msra.mxu0 0.0
    %770 = vmatprep.subr.mxu0 0.0
    %771 = vmatpush2.msra.mxu0 0.0
    %772 = vmatprep.subr.mxu0 0.0
    %773 = vmatpush2.msra.mxu0 0.0
    %774 = vmatprep.subr.mxu0 0.0
    %775 = vmatpush2.msra.mxu0 0.0
    %776 = vmatprep.mubr.f32.mxu0 0.0
    %777 = vmatmul.mubr.f32.gmra.mxu0 %v484
    %v778 = vpop.f32.mrf.mxu0
    %v779 = vadd.f32 %v709, %v778
    %v780 = vpop.f32.mrf.mxu0
    %781 = vdwg.mxu0
    %v782 = vtanh.pop %v779
    %v783 = vld [vmem:[%s5] sm:$0xff]
    %v784 = vld [vmem:[%s5 + $0x8] sm:$0xff]
    %v785 = vld [vmem:[%s5 + $0x10] sm:$0xff]
    %v786 = vld [vmem:[%s5 + $0x18] sm:$0xff]
    %v787 = vld [vmem:[%s5 + $0x20] sm:$0xff]
    %v788 = vld [vmem:[%s5 + $0x28] sm:$0xff]
    %v789 = vld [vmem:[%s5 + $0x30] sm:$0xff]
    %v790 = vld [vmem:[%s5 + $0x38] sm:$0xff]
    %v791 = vld [vmem:[%s6] sm:$0x1]
    %v793 = vlaneseq
    %v794 = vshrl.u32 %v793, 7
    %v795 = vsub.s32 0, %v794
    %v796 = vrot.slane %v791, %v795
    %vm798 = vcmask 523264
    %v800 = vsel %vm798, %v782, 0
    %802 = vmatprep.subr.mxu0 0.0
    %803 = vmatpush1.msra.mxu0 0.0
    %804 = vmatprep.subr.mxu0 0.0
    %805 = vmatpush1.msra.mxu0 0.0
    %806 = vmatprep.subr.mxu0 0.0
    %807 = vmatpush1.msra.mxu0 0.0
    %808 = vmatprep.subr.mxu0 0.0
    %809 = vmatpush1.msra.mxu0 0.0
    %810 = vmatprep.subr.mxu0 0.0
    %811 = vmatpush1.msra.mxu0 0.0
    %812 = vmatprep.subr.mxu0 0.0
    %813 = vmatpush1.msra.mxu0 0.0
    %814 = vmatprep.subr.mxu0 0.0
    %815 = vmatpush1.msra.mxu0 0.0
    %816 = vmatprep.subr.mxu0 0.0
    %817 = vmatpush1.msra.mxu0 0.0
    %818 = vmatprep.subr.mxu0 0.0
    %819 = vmatpush1.msra.mxu0 %v790
    %820 = vmatprep.subr.mxu0 0.0
    %821 = vmatpush1.msra.mxu0 %v789
    %822 = vmatprep.subr.mxu0 0.0
    %823 = vmatpush1.msra.mxu0 %v788
    %824 = vmatprep.subr.mxu0 0.0
    %825 = vmatpush1.msra.mxu0 %v787
    %826 = vmatprep.subr.mxu0 0.0
    %827 = vmatpush1.msra.mxu0 %v786
    %828 = vmatprep.subr.mxu0 0.0
    %829 = vmatpush1.msra.mxu0 %v785
    %830 = vmatprep.subr.mxu0 0.0
    %831 = vmatpush1.msra.mxu0 %v784
    %832 = vmatprep.subr.mxu0 0.0
    %833 = vmatpush1.msra.mxu0 %v783
    %834 = vmatprep.subr.mxu0 0.0
    %835 = vmatpush2.msra.mxu0 0.0
    %836 = vmatprep.subr.mxu0 0.0
    %837 = vmatpush2.msra.mxu0 0.0
    %838 = vmatprep.subr.mxu0 0.0
    %839 = vmatpush2.msra.mxu0 0.0
    %840 = vmatprep.subr.mxu0 0.0
    %841 = vmatpush2.msra.mxu0 0.0
    %842 = vmatprep.subr.mxu0 0.0
    %843 = vmatpush2.msra.mxu0 0.0
    %844 = vmatprep.subr.mxu0 0.0
    %845 = vmatpush2.msra.mxu0 0.0
    %846 = vmatprep.subr.mxu0 0.0
    %847 = vmatpush2.msra.mxu0 0.0
    %848 = vmatprep.subr.mxu0 0.0
    %849 = vmatpush2.msra.mxu0 0.0
    %850 = vmatprep.subr.mxu0 0.0
    %851 = vmatpush2.msra.mxu0 0.0
    %852 = vmatprep.subr.mxu0 0.0
    %853 = vmatpush2.msra.mxu0 0.0
    %854 = vmatprep.subr.mxu0 0.0
    %855 = vmatpush2.msra.mxu0 0.0
    %856 = vmatprep.subr.mxu0 0.0
    %857 = vmatpush2.msra.mxu0 0.0
    %858 = vmatprep.subr.mxu0 0.0
    %859 = vmatpush2.msra.mxu0 0.0
    %860 = vmatprep.subr.mxu0 0.0
    %861 = vmatpush2.msra.mxu0 0.0
    %862 = vmatprep.subr.mxu0 0.0
    %863 = vmatpush2.msra.mxu0 0.0
    %864 = vmatprep.subr.mxu0 0.0
    %865 = vmatpush2.msra.mxu0 0.0
    %866 = vmatprep.mubr.f32.mxu0 0.0
    %867 = vmatmul.mubr.f32.gmra.mxu0 %v800
    %v868 = vpop.f32.mrf.mxu0
    %v869 = vadd.f32 %v796, %v868
    %v870 = vpop.f32.mrf.mxu0
    %871 = vdwg.mxu0
    %v872 = vmax.f32 %v869, 0.0
    %v873 = vld [vmem:[%s7] sm:$0xff]
    %v874 = vld [vmem:[%s7 + $0x8] sm:$0xff]
    %v875 = vld [vmem:[%s7 + $0x10] sm:$0xff]
    %v876 = vld [vmem:[%s7 + $0x18] sm:$0xff]
    %v877 = vld [vmem:[%s7 + $0x20] sm:$0xff]
    %v878 = vld [vmem:[%s7 + $0x28] sm:$0xff]
    %v879 = vld [vmem:[%s7 + $0x30] sm:$0xff]
    %v880 = vld [vmem:[%s7 + $0x38] sm:$0xff]
    %v881 = vld [vmem:[%s7 + $0x40] sm:$0xff]
    %v882 = vld [vmem:[%s7 + $0x48] sm:$0xff]
    %v883 = vld [vmem:[%s7 + $0x50] sm:$0xff]
    %v884 = vld [vmem:[%s7 + $0x58] sm:$0xff]
    %v885 = vld [vmem:[%s7 + $0x60] sm:$0xff]
    %v886 = vld [vmem:[%s7 + $0x68] sm:$0xff]
    %v887 = vld [vmem:[%s7 + $0x70] sm:$0xff]
    %v888 = vld [vmem:[%s7 + $0x78] sm:$0xff]
    %v889 = vld [vmem:[%s8] sm:$0x1]
    %v891 = vlaneseq
    %v892 = vshrl.u32 %v891, 7
    %v893 = vsub.s32 0, %v892
    %v894 = vrot.slane %v889, %v893
    %896 = vmatprep.subr.mxu0 0.0
    %897 = vmatpush1.msra.mxu0 %v888
    %898 = vmatprep.subr.mxu0 0.0
    %899 = vmatpush1.msra.mxu0 %v887
    %900 = vmatprep.subr.mxu0 0.0
    %901 = vmatpush1.msra.mxu0 %v886
    %902 = vmatprep.subr.mxu0 0.0
    %903 = vmatpush1.msra.mxu0 %v885
    %904 = vmatprep.subr.mxu0 0.0
    %905 = vmatpush1.msra.mxu0 %v884
    %906 = vmatprep.subr.mxu0 0.0
    %907 = vmatpush1.msra.mxu0 %v883
    %908 = vmatprep.subr.mxu0 0.0
    %909 = vmatpush1.msra.mxu0 %v882
    %910 = vmatprep.subr.mxu0 0.0
    %911 = vmatpush1.msra.mxu0 %v881
    %912 = vmatprep.subr.mxu0 0.0
    %913 = vmatpush1.msra.mxu0 %v880
    %914 = vmatprep.subr.mxu0 0.0
    %915 = vmatpush1.msra.mxu0 %v879
    %916 = vmatprep.subr.mxu0 0.0
    %917 = vmatpush1.msra.mxu0 %v878
    %918 = vmatprep.subr.mxu0 0.0
    %919 = vmatpush1.msra.mxu0 %v877
    %920 = vmatprep.subr.mxu0 0.0
    %921 = vmatpush1.msra.mxu0 %v876
    %922 = vmatprep.subr.mxu0 0.0
    %923 = vmatpush1.msra.mxu0 %v875
    %924 = vmatprep.subr.mxu0 0.0
    %925 = vmatpush1.msra.mxu0 %v874
    %926 = vmatprep.subr.mxu0 0.0
    %927 = vmatpush1.msra.mxu0 %v873
    %928 = vmatprep.subr.mxu0 0.0
    %929 = vmatpush2.msra.mxu0 0.0
    %930 = vmatprep.subr.mxu0 0.0
    %931 = vmatpush2.msra.mxu0 0.0
    %932 = vmatprep.subr.mxu0 0.0
    %933 = vmatpush2.msra.mxu0 0.0
    %934 = vmatprep.subr.mxu0 0.0
    %935 = vmatpush2.msra.mxu0 0.0
    %936 = vmatprep.subr.mxu0 0.0
    %937 = vmatpush2.msra.mxu0 0.0
    %938 = vmatprep.subr.mxu0 0.0
    %939 = vmatpush2.msra.mxu0 0.0
    %940 = vmatprep.subr.mxu0 0.0
    %941 = vmatpush2.msra.mxu0 0.0
    %942 = vmatprep.subr.mxu0 0.0
    %943 = vmatpush2.msra.mxu0 0.0
    %944 = vmatprep.subr.mxu0 0.0
    %945 = vmatpush2.msra.mxu0 0.0
    %946 = vmatprep.subr.mxu0 0.0
    %947 = vmatpush2.msra.mxu0 0.0
    %948 = vmatprep.subr.mxu0 0.0
    %949 = vmatpush2.msra.mxu0 0.0
    %950 = vmatprep.subr.mxu0 0.0
    %951 = vmatpush2.msra.mxu0 0.0
    %952 = vmatprep.subr.mxu0 0.0
    %953 = vmatpush2.msra.mxu0 0.0
    %954 = vmatprep.subr.mxu0 0.0
    %955 = vmatpush2.msra.mxu0 0.0
    %956 = vmatprep.subr.mxu0 0.0
    %957 = vmatpush2.msra.mxu0 0.0
    %958 = vmatprep.subr.mxu0 0.0
    %959 = vmatpush2.msra.mxu0 0.0
    %960 = vmatprep.mubr.f32.mxu0 0.0
    %961 = vmatmul.mubr.f32.gmra.mxu0 %v872
    %v962 = vpop.f32.mrf.mxu0
    %v963 = vadd.f32 %v894, %v962
    %v964 = vpop.f32.mrf.mxu0
    %965 = vdwg.mxu0
    %966 = vst [vmem:[#allocation2] sm:$0xff] %v963
    // Predicated region
    $region38: #{cnn_rnn_forward.1} parent=1 // pred_check
      _
    $region39: #{cnn_rnn_forward.1} parent=1 // pred_check_branch
      %968 = sbr.rel (0) target = $region41
    $region40: #{cnn_rnn_forward.1} parent=1 // pred_region
      %s970 = ssub.s32 128, 128
      %971 = vsyncadd [#allocation3], %s970
      %s973 = sshll.u32 [#allocation2], 4
      %s974 = int_to_ptr.vmem [resolvable:$true] %s973
      %976 = dma.vmem_to_hbm [thread:$0]  %s974, 128, %s9, [#allocation3]
    $region41: #{cnn_rnn_forward.1} parent=1 // pred_fallthru
      _
    // Predicated region
    $region42: #{cnn_rnn_forward.1} parent=1 // pred_check
      _
    $region43: #{cnn_rnn_forward.1} parent=1 // pred_check_branch
      %978 = sbr.rel (0) target = $region45
    $region44: #{cnn_rnn_forward.1} parent=1 // pred_region
      %979 = dma.done [#allocation3], 128
    $region45: #{cnn_rnn_forward.1} parent=1 // pred_fallthru
      _
    %980 = vsyncpa [#allocation3], 1

</llo_original>
